<compile_context>
chip_gen: v7x
topology: tpu7x:2x2x1
jax: 0.10.0
libtpu: 0.0.40
codegen_flags: <defaults>
</compile_context>

<pallas_src>
import functools

import numpy as np
import jax
import jax.numpy as jnp
from jax.experimental import pallas as pl
from jax.experimental.pallas import tpu as pltpu


# ----------------------------- kernel ---------------------------------------

def _elu(x):
    # PyTorch torch.nn.ELU with alpha=1.0 (computed in f32, exp on the EUP slot)
    return jnp.where(x > 0, x, jnp.exp(jnp.minimum(x, 0.0)) - 1.0)


def _mlp_cmap_kernel(n_hidden,
                     pad_ref, w1_ref, b1_ref, wh_ref, bh_ref,
                     wout_ref, bout_ref, out_ref):
    # Linear(max_n_atoms -> H) + ELU.  bf16 MXU inputs, f32 accumulation.
    h = jnp.dot(pad_ref[...].astype(jnp.bfloat16), w1_ref[...],
                preferred_element_type=jnp.float32)
    h = _elu(h + b1_ref[...])

    # (n_layers - 1) hidden Linear(H -> H) + ELU, statically unrolled.
    for l in range(n_hidden):
        h = jnp.dot(h.astype(jnp.bfloat16), wh_ref[l],
                    preferred_element_type=jnp.float32)
        h = _elu(h + bh_ref[l])

    # Final Linear with the symmetric upper-triangular scatter pre-folded into
    # its weight/bias (W_out = wl @ S, b_out = bl @ S; exact column copies).
    out_ref[...] = (jnp.dot(h.astype(jnp.bfloat16), wout_ref[...],
                            preferred_element_type=jnp.float32)
                    + bout_ref[...])


# ----------------------------- tiling / wrapper ------------------------------

def _batch_tiling(B, num_tiles, tm_cap=128):
    """Pick (tm, nb, Bp).  Prefer one full-array block => no pad, no slice."""
    if num_tiles <= 1 and B <= tm_cap:
        return B, 1, B                      # block == full array, no 8-rounding
    tm = min(tm_cap, max(8, -(-B // max(1, num_tiles))))
    tm = -(-tm // 8) * 8                    # multi-tile blocks need 8-sublane rows
    nb = -(-B // tm)
    return tm, nb, nb * tm


def _default_num_batch_tiles():
    """One batch tile per TensorCore (1 on v5e/v6e, 2 on v7x); safe fallback 1."""
    try:
        d = jax.devices()[0]
        for attr in ("num_cores", "core_count"):
            v = getattr(d, attr, None)
            if isinstance(v, int) and v >= 1:
                return min(int(v), 2)
    except Exception:
        pass
    return 1


def autoencoder_cmap_pallas(my_pad, params, *, num_tiles=1):
    """my_pad: (B, N) f32; params = (w1_bf16, b1, wh_bf16, bh, w_out_bf16, b_out)."""
    w1, b1, wh, bh, w_out, b_out = params
    B, N = my_pad.shape
    out_dim = w_out.shape[1]
    n_hidden = wh.shape[0]

    tm, nb, Bp = _batch_tiling(B, num_tiles)
    if Bp != B:                              # fallback only; avoided on common path
        my_pad = jnp.pad(my_pad, ((0, Bp - B), (0, 0)))

    kernel = functools.partial(_mlp_cmap_kernel, n_hidden)

    out = pl.pallas_call(
        kernel,
        out_shape=jax.ShapeDtypeStruct((Bp, out_dim), jnp.float32),
        grid_spec=pltpu.PrefetchScalarGridSpec(
            num_scalar_prefetch=0,
            grid=(nb,),
            in_specs=[
                pl.BlockSpec((tm, N), lambda i: (i, 0)),       # batch tile
                pl.BlockSpec(w1.shape, lambda i: (0, 0)),      # weights stay
                pl.BlockSpec(b1.shape, lambda i: (0, 0)),      # resident
                pl.BlockSpec(wh.shape, lambda i: (0, 0, 0)),
                pl.BlockSpec(bh.shape, lambda i: (0, 0, 0)),
                pl.BlockSpec(w_out.shape, lambda i: (0, 0)),
                pl.BlockSpec(b_out.shape, lambda i: (0, 0)),
            ],
            out_specs=pl.BlockSpec((tm, out_dim), lambda i: (i, 0)),
        ),
        compiler_params=pltpu.CompilerParams(
            dimension_semantics=("parallel",)),   # batch tiles -> 2 TCs on v7x
    )(my_pad, w1, b1, wh, bh, w_out, b_out)
    return out if Bp == B else out[:B]


# ----------------------------- glue (plain JAX, fused under one jit) ---------

def build_padded(x_cmap_flat, ptr, batch_size, max_n_atoms):
    """my_pad[i, 0:n_i] = x_cmap[ptr[i]:ptr[i+1]], rest zero (ragged gather)."""
    counts = ptr[1:] - ptr[:-1]                                  # (B,)
    cols = jnp.arange(max_n_atoms, dtype=jnp.int32)[None, :]     # (1, N)
    idx = ptr[:-1, None] + cols                                  # (B, N)
    valid = cols < counts[:, None]
    total = x_cmap_flat.shape[0]
    gathered = x_cmap_flat[jnp.clip(idx, 0, total - 1)]
    return jnp.where(valid, gathered, 0.0).astype(jnp.float32)


@functools.partial(jax.jit, static_argnames=("max_n_atoms", "num_tiles"))
def autoencoder_cmap_forward(x_cmap, ptr, params, *, max_n_atoms, num_tiles=1):
    """Single dispatch: ragged gather + MLP + folded triu scatter."""
    B = ptr.shape[0] - 1
    my_pad = build_padded(x_cmap, ptr, B, max_n_atoms)
    return autoencoder_cmap_pallas(my_pad, params, num_tiles=num_tiles)


def build_triu_scatter(N):
    """S[t, a*N+b] = 1 where (a,b)/(b,a) is the t-th upper-tri index."""
    ii, jj = np.triu_indices(N)          # same order as torch.triu_indices
    T = ii.shape[0]
    S = np.zeros((T, N * N), dtype=np.float32)
    t = np.arange(T)
    S[t, ii * N + jj] = 1.0
    S[t, jj * N + ii] = 1.0
    return jnp.asarray(S)


def fold_scatter_into_last_linear(wl, bl, N):
    """W_out = wl @ S, b_out = bl @ S (exact: S has one 1 per column)."""
    S = build_triu_scatter(N)                          # (T, N*N)
    w_out = (wl @ S).astype(jnp.bfloat16)              # (H, N*N)
    b_out = bl @ S                                     # (1, N*N) f32
    return w_out, b_out


def init_linear(key, fan_in, fan_out):
    """PyTorch nn.Linear default init: U(-1/sqrt(fan_in), 1/sqrt(fan_in))."""
    kw, kb = jax.random.split(key)
    bound = 1.0 / np.sqrt(fan_in)
    w = jax.random.uniform(kw, (fan_in, fan_out), jnp.float32, -bound, bound)
    b = jax.random.uniform(kb, (1, fan_out), jnp.float32, -bound, bound)
    return w, b


# ----------------------------- pure-JAX references ---------------------------

def _scatter_triu(diag, N):
    B = diag.shape[0]
    ii, jj = np.triu_indices(N)
    x1 = jnp.zeros((B, N, N), jnp.float32)
    x1 = x1.at[:, ii, jj].set(diag)
    x1 = x1.at[:, jj, ii].set(diag)
    return x1.reshape(B, N * N)


def reference_forward_bf16(my_pad, params_f32, N):
    """Mirrors the kernel's bf16-input / f32-accum math, unfused scatter."""
    w1, b1, wh, bh, wl, bl = params_f32
    mm = lambda a, b: jnp.dot(a.astype(jnp.bfloat16), b.astype(jnp.bfloat16),
                              preferred_element_type=jnp.float32)
    h = _elu(mm(my_pad, w1) + b1)
    for l in range(wh.shape[0]):
        h = _elu(mm(h, wh[l]) + bh[l])
    diag = mm(h, wl) + bl
    return _scatter_triu(diag, N)


def reference_forward_f32(my_pad, params_f32, N):
    """Original (all-f32) PyTorch semantics."""
    w1, b1, wh, bh, wl, bl = params_f32
    h = _elu(my_pad @ w1 + b1)
    for l in range(wh.shape[0]):
        h = _elu(h @ wh[l] + bh[l])
    diag = h @ wl + bl
    return _scatter_triu(diag, N)


# ----------------------------- main ------------------------------------------

if __name__ == "__main__":
    B = 64                # batch_size (many graphs per call)
    N = 16                # max_n_atoms
    H = 32                # n_nodes_mlp_cmap
    L = 2                 # n_layers_mlp_cmap  (=> 1 hidden layer)
    NUM_ATOM_TYPES = 5    # num_atoms_type (node feature dim for synthetic SN_cmap)

    key = jax.random.PRNGKey(0)
    k_feat, k_sn, k1, kh, kl = jax.random.split(key, 5)

    # Synthetic graph batch ("item"): per-graph atom counts and node features.
    n_atoms = np.random.RandomState(0).randint(4, N + 1, size=B).astype(np.int32)
    ptr = jnp.asarray(np.concatenate([[0], np.cumsum(n_atoms)]).astype(np.int32))
    total_nodes = int(np.cumsum(n_atoms)[-1])
    node_feat = jax.random.normal(k_feat, (total_nodes, NUM_ATOM_TYPES), jnp.float32)

    # SN_cmap modeled as a deterministic per-node linear producing one scalar/node.
    w_sn = jax.random.normal(k_sn, (NUM_ATOM_TYPES, 1), jnp.float32) * 0.1
    x_cmap = (node_feat @ w_sn)[:, 0]                     # (total_nodes,)

    # mlp_cmap parameters (ELU activation branch), PyTorch-default init.
    w1, b1 = init_linear(k1, N, H)
    hidden = [init_linear(k, H, H) for k in jax.random.split(kh, L - 1)]
    wh = jnp.stack([w for w, _ in hidden])                # (L-1, H, H)
    bh = jnp.stack([b for _, b in hidden])                # (L-1, 1, H)
    wl, bl = init_linear(kl, H, N * (N + 1) // 2)
    params_f32 = (w1, b1, wh, bh, wl, bl)

    # Kernel params: bf16 weights, triu scatter folded into the last Linear.
    w_out, b_out = fold_scatter_into_last_linear(wl, bl, N)
    params_kernel = (w1.astype(jnp.bfloat16), b1,
                     wh.astype(jnp.bfloat16), bh, w_out, b_out)

    num_tiles = _default_num_batch_tiles()   # 1 on v5e/v6e, 2 on v7x
    out = autoencoder_cmap_forward(x_cmap, ptr, params_kernel,
                                   max_n_atoms=N, num_tiles=num_tiles)  # (B, N*N)
    out = jax.block_until_ready(out)

    # Tight check vs. a reference that mirrors the kernel's bf16/f32 math.
    my_pad = build_padded(x_cmap, ptr, B, N)              # (B, N) f32
    ref_bf16 = reference_forward_bf16(my_pad, params_f32, N)
    np.testing.assert_allclose(np.asarray(out), np.asarray(ref_bf16),
                               rtol=1e-3, atol=1e-3)
    # Loose check vs. the original all-f32 module semantics (bf16 cast error).
    ref_f32 = reference_forward_f32(my_pad, params_f32, N)
    np.testing.assert_allclose(np.asarray(out), np.asarray(ref_f32),
                               rtol=3e-2, atol=3e-2)
    print("KERNEL_OK")
</pallas_src>

<mosaic_0001>
module attributes {stable_mosaic.version = 11 : i64} {
  func.func @_mlp_cmap_kernel(%arg0: i32, %arg1: memref<64x16xf32, #tpu.memory_space<vmem>>, %arg2: memref<16x32xbf16, #tpu.memory_space<vmem>>, %arg3: memref<1x32xf32, #tpu.memory_space<vmem>>, %arg4: memref<1x32x32xbf16, #tpu.memory_space<vmem>>, %arg5: memref<1x1x32xf32, #tpu.memory_space<vmem>>, %arg6: memref<32x256xbf16, #tpu.memory_space<vmem>>, %arg7: memref<1x256xf32, #tpu.memory_space<vmem>>, %arg8: memref<64x256xf32, #tpu.memory_space<vmem>>) attributes {dimension_semantics = [#tpu.dimension_semantics<parallel>], iteration_bounds = array<i64: 1>, scalar_prefetch = 0 : i64, scratch_operands = 0 : i64, tpu.core_type = #tpu.core_type<tc>, window_params = [{transform_indices = @transform_0, window_bounds = array<i64: 64, 16>}, {pipeline_mode = #tpu.pipeline_mode<synchronous>, transform_indices = @transform_1, window_bounds = array<i64: 16, 32>}, {pipeline_mode = #tpu.pipeline_mode<synchronous>, transform_indices = @transform_2, window_bounds = array<i64: 1, 32>}, {pipeline_mode = #tpu.pipeline_mode<synchronous>, transform_indices = @transform_3, window_bounds = array<i64: 1, 32, 32>}, {pipeline_mode = #tpu.pipeline_mode<synchronous>, transform_indices = @transform_4, window_bounds = array<i64: 1, 1, 32>}, {pipeline_mode = #tpu.pipeline_mode<synchronous>, transform_indices = @transform_5, window_bounds = array<i64: 32, 256>}, {pipeline_mode = #tpu.pipeline_mode<synchronous>, transform_indices = @transform_6, window_bounds = array<i64: 1, 256>}, {transform_indices = @transform_7, window_bounds = array<i64: 64, 256>}]} {
    %c0 = arith.constant 0 : index
    %c0_0 = arith.constant 0 : index
    %0 = vector.load %arg1[%c0, %c0_0] : memref<64x16xf32, #tpu.memory_space<vmem>>, vector<64x16xf32>
    %1 = arith.truncf %0 : vector<64x16xf32> to vector<64x16xbf16>
    %c0_1 = arith.constant 0 : index
    %c0_2 = arith.constant 0 : index
    %2 = vector.load %arg2[%c0_1, %c0_2] : memref<16x32xbf16, #tpu.memory_space<vmem>>, vector<16x32xbf16>
    %cst = arith.constant dense<0.000000e+00> : vector<64x32xf32>
    %3 = tpu.matmul %1, %2, %cst {dimension_numbers = #tpu.dot_dimension_numbers<[1], [0], [0], [1], [0, 0, 1, 1], [], []>} : vector<64x16xbf16>, vector<16x32xbf16>, vector<64x32xf32> -> vector<64x32xf32>
    %c0_3 = arith.constant 0 : index
    %c0_4 = arith.constant 0 : index
    %4 = vector.load %arg3[%c0_3, %c0_4] : memref<1x32xf32, #tpu.memory_space<vmem>>, vector<1x32xf32>
    %5 = vector.broadcast %4 : vector<1x32xf32> to vector<64x32xf32>
    %6 = arith.addf %3, %5 : vector<64x32xf32>
    %cst_5 = arith.constant 0.000000e+00 : f32
    %7 = vector.broadcast %cst_5 : f32 to vector<64x32xf32>
    %8 = arith.cmpf ogt, %6, %7 : vector<64x32xf32>
    %cst_6 = arith.constant 0.000000e+00 : f32
    %9 = vector.broadcast %cst_6 : f32 to vector<64x32xf32>
    %10 = arith.minimumf %6, %9 : vector<64x32xf32>
    %11 = math.exp %10 : vector<64x32xf32>
    %cst_7 = arith.constant 1.000000e+00 : f32
    %12 = vector.broadcast %cst_7 : f32 to vector<64x32xf32>
    %13 = arith.subf %11, %12 : vector<64x32xf32>
    %14 = arith.select %8, %6, %13 : vector<64x32xi1>, vector<64x32xf32>
    %15 = arith.truncf %14 : vector<64x32xf32> to vector<64x32xbf16>
    %c0_8 = arith.constant 0 : index
    %c0_9 = arith.constant 0 : index
    %c0_10 = arith.constant 0 : index
    %16 = vector.load %arg4[%c0_8, %c0_9, %c0_10] : memref<1x32x32xbf16, #tpu.memory_space<vmem>>, vector<1x32x32xbf16>
    %17 = vector.shape_cast %16 : vector<1x32x32xbf16> to vector<32x32xbf16>
    %cst_11 = arith.constant dense<0.000000e+00> : vector<64x32xf32>
    %18 = tpu.matmul %15, %17, %cst_11 {dimension_numbers = #tpu.dot_dimension_numbers<[1], [0], [0], [1], [0, 0, 1, 1], [], []>} : vector<64x32xbf16>, vector<32x32xbf16>, vector<64x32xf32> -> vector<64x32xf32>
    %c0_12 = arith.constant 0 : index
    %c0_13 = arith.constant 0 : index
    %c0_14 = arith.constant 0 : index
    %19 = vector.load %arg5[%c0_12, %c0_13, %c0_14] : memref<1x1x32xf32, #tpu.memory_space<vmem>>, vector<1x1x32xf32>
    %20 = vector.shape_cast %19 : vector<1x1x32xf32> to vector<1x32xf32>
    %21 = vector.broadcast %20 : vector<1x32xf32> to vector<64x32xf32>
    %22 = arith.addf %18, %21 : vector<64x32xf32>
    %cst_15 = arith.constant 0.000000e+00 : f32
    %23 = vector.broadcast %cst_15 : f32 to vector<64x32xf32>
    %24 = arith.cmpf ogt, %22, %23 : vector<64x32xf32>
    %cst_16 = arith.constant 0.000000e+00 : f32
    %25 = vector.broadcast %cst_16 : f32 to vector<64x32xf32>
    %26 = arith.minimumf %22, %25 : vector<64x32xf32>
    %27 = math.exp %26 : vector<64x32xf32>
    %cst_17 = arith.constant 1.000000e+00 : f32
    %28 = vector.broadcast %cst_17 : f32 to vector<64x32xf32>
    %29 = arith.subf %27, %28 : vector<64x32xf32>
    %30 = arith.select %24, %22, %29 : vector<64x32xi1>, vector<64x32xf32>
    %31 = arith.truncf %30 : vector<64x32xf32> to vector<64x32xbf16>
    %c0_18 = arith.constant 0 : index
    %c0_19 = arith.constant 0 : index
    %32 = vector.load %arg6[%c0_18, %c0_19] : memref<32x256xbf16, #tpu.memory_space<vmem>>, vector<32x256xbf16>
    %cst_20 = arith.constant dense<0.000000e+00> : vector<64x256xf32>
    %33 = tpu.matmul %31, %32, %cst_20 {dimension_numbers = #tpu.dot_dimension_numbers<[1], [0], [0], [1], [0, 0, 1, 1], [], []>} : vector<64x32xbf16>, vector<32x256xbf16>, vector<64x256xf32> -> vector<64x256xf32>
    %c0_21 = arith.constant 0 : index
    %c0_22 = arith.constant 0 : index
    %34 = vector.load %arg7[%c0_21, %c0_22] : memref<1x256xf32, #tpu.memory_space<vmem>>, vector<1x256xf32>
    %35 = vector.broadcast %34 : vector<1x256xf32> to vector<64x256xf32>
    %36 = arith.addf %33, %35 : vector<64x256xf32>
    %c0_23 = arith.constant 0 : index
    %c0_24 = arith.constant 0 : index
    %37 = vector.load %arg8[%c0_23, %c0_24] : memref<64x256xf32, #tpu.memory_space<vmem>>, vector<64x256xf32>
    tpu.vector_store %arg8[%c0_23, %c0_24], %36 {strides = array<i32>} : memref<64x256xf32, #tpu.memory_space<vmem>>, vector<64x256xf32>,
    return
  }
  func.func @transform_0(%arg0: i32) -> (i32, i32) {
    %c0_i32 = arith.constant 0 : i32
    %c0_i32_0 = arith.constant 0 : i32
    return %arg0, %c0_i32 : i32, i32
  }
  func.func @transform_1(%arg0: i32) -> (i32, i32) {
    %c0_i32 = arith.constant 0 : i32
    %c0_i32_0 = arith.constant 0 : i32
    %c0_i32_1 = arith.constant 0 : i32
    return %c0_i32, %c0_i32_0 : i32, i32
  }
  func.func @transform_2(%arg0: i32) -> (i32, i32) {
    %c0_i32 = arith.constant 0 : i32
    %c0_i32_0 = arith.constant 0 : i32
    %c0_i32_1 = arith.constant 0 : i32
    return %c0_i32, %c0_i32_0 : i32, i32
  }
  func.func @transform_3(%arg0: i32) -> (i32, i32, i32) {
    %c0_i32 = arith.constant 0 : i32
    %c0_i32_0 = arith.constant 0 : i32
    %c0_i32_1 = arith.constant 0 : i32
    %c0_i32_2 = arith.constant 0 : i32
    return %c0_i32, %c0_i32_0, %c0_i32_1 : i32, i32, i32
  }
  func.func @transform_4(%arg0: i32) -> (i32, i32, i32) {
    %c0_i32 = arith.constant 0 : i32
    %c0_i32_0 = arith.constant 0 : i32
    %c0_i32_1 = arith.constant 0 : i32
    %c0_i32_2 = arith.constant 0 : i32
    return %c0_i32, %c0_i32_0, %c0_i32_1 : i32, i32, i32
  }
  func.func @transform_5(%arg0: i32) -> (i32, i32) {
    %c0_i32 = arith.constant 0 : i32
    %c0_i32_0 = arith.constant 0 : i32
    %c0_i32_1 = arith.constant 0 : i32
    return %c0_i32, %c0_i32_0 : i32, i32
  }
  func.func @transform_6(%arg0: i32) -> (i32, i32) {
    %c0_i32 = arith.constant 0 : i32
    %c0_i32_0 = arith.constant 0 : i32
    %c0_i32_1 = arith.constant 0 : i32
    return %c0_i32, %c0_i32_0 : i32, i32
  }
  func.func @transform_7(%arg0: i32) -> (i32, i32) {
    %c0_i32 = arith.constant 0 : i32
    %c0_i32_0 = arith.constant 0 : i32
    return %arg0, %c0_i32 : i32, i32
  }
}

</mosaic_0001>

<llo_original>
// kernel: autoencoder_cmap_forward.1
$region0: #{autoencoder_cmap_forward.1}
  #allocation0 [shape = 'u32[]', space=smem, size = 0x4, offset = 0x4, fixed_abs, tag = 'smem constant byte address 0x4 - core index']
  #allocation1 [shape = 'u32[144,128]{1,0:T(1,128)}', space=vmem, size = 0x12000, scoped, tag = 'internal scratch']
  %s0 = inlined_call_operand.vmem [shape: f32[64,16], index: 0, kind: input, shape index: {}]
  %s1 = inlined_call_operand.vmem [shape: bf16[16,32], index: 1, kind: input, shape index: {}]
  %s2 = inlined_call_operand.vmem [shape: f32[1,32], index: 2, kind: input, shape index: {}]
  %s3 = inlined_call_operand.vmem [shape: bf16[1,32,32], index: 3, kind: input, shape index: {}]
  %s4 = inlined_call_operand.vmem [shape: f32[1,1,32], index: 4, kind: input, shape index: {}]
  %s5 = inlined_call_operand.vmem [shape: bf16[32,256], index: 5, kind: input, shape index: {}]
  %s6 = inlined_call_operand.vmem [shape: f32[1,256], index: 6, kind: input, shape index: {}]
  %s7 = inlined_call_operand.hbm [shape: f32[64,256], index: 7, kind: output, shape index: {}]
  %s8 = sld [smem:[#allocation0]]
  $region38: #{autoencoder_cmap_forward.1} parent=0
    _
  %s10 = ssub.s32 1, %s8
  %s11 = scalar_select 0, %s10, %s8
  $region1: #{autoencoder_cmap_forward.1} parent=0
    #allocation2 [shape = 'u8[65536]{0}', space=vmem, size = 0x10000, scoped, tag = 'output window, operand 0, single buffered']
    #allocation3 [shape = 's32[1]{0}', space=sflag, size = 0x4, scoped, tag = 'scoped memory for autoencoder_cmap_forward.1']
    %12 = vsyncpa [#allocation3], 0
    // Predicated region
    $region2: #{autoencoder_cmap_forward.1} parent=1 // pred_check
      _
    $region3: #{autoencoder_cmap_forward.1} parent=1 // pred_check_branch
      %14 = sbr.rel (0) target = $region5
    $region4: #{autoencoder_cmap_forward.1} parent=1 // pred_region
      _
    $region5: #{autoencoder_cmap_forward.1} parent=1 // pred_fallthru
      _
    // Predicated region
    $region6: #{autoencoder_cmap_forward.1} parent=1 // pred_check
      _
    $region7: #{autoencoder_cmap_forward.1} parent=1 // pred_check_branch
      %16 = sbr.rel (0) target = $region9
    $region8: #{autoencoder_cmap_forward.1} parent=1 // pred_region
      _
    $region9: #{autoencoder_cmap_forward.1} parent=1 // pred_fallthru
      _
    // Predicated region
    $region10: #{autoencoder_cmap_forward.1} parent=1 // pred_check
      _
    $region11: #{autoencoder_cmap_forward.1} parent=1 // pred_check_branch
      %18 = sbr.rel (0) target = $region13
    $region12: #{autoencoder_cmap_forward.1} parent=1 // pred_region
      _
    $region13: #{autoencoder_cmap_forward.1} parent=1 // pred_fallthru
      _
    // Predicated region
    $region14: #{autoencoder_cmap_forward.1} parent=1 // pred_check
      _
    $region15: #{autoencoder_cmap_forward.1} parent=1 // pred_check_branch
      %20 = sbr.rel (0) target = $region17
    $region16: #{autoencoder_cmap_forward.1} parent=1 // pred_region
      _
    $region17: #{autoencoder_cmap_forward.1} parent=1 // pred_fallthru
      _
    // Predicated region
    $region18: #{autoencoder_cmap_forward.1} parent=1 // pred_check
      _
    $region19: #{autoencoder_cmap_forward.1} parent=1 // pred_check_branch
      %22 = sbr.rel (0) target = $region21
    $region20: #{autoencoder_cmap_forward.1} parent=1 // pred_region
      _
    $region21: #{autoencoder_cmap_forward.1} parent=1 // pred_fallthru
      _
    // Predicated region
    $region22: #{autoencoder_cmap_forward.1} parent=1 // pred_check
      _
    $region23: #{autoencoder_cmap_forward.1} parent=1 // pred_check_branch
      %24 = sbr.rel (0) target = $region25
    $region24: #{autoencoder_cmap_forward.1} parent=1 // pred_region
      _
    $region25: #{autoencoder_cmap_forward.1} parent=1 // pred_fallthru
      _
    // Predicated region
    $region26: #{autoencoder_cmap_forward.1} parent=1 // pred_check
      _
    $region27: #{autoencoder_cmap_forward.1} parent=1 // pred_check_branch
      %26 = sbr.rel (0) target = $region29
    $region28: #{autoencoder_cmap_forward.1} parent=1 // pred_region
      _
    $region29: #{autoencoder_cmap_forward.1} parent=1 // pred_fallthru
      _
    %v28 = vld [vmem:[%s0] sm:$0xff]
    %v29 = vld [vmem:[%s0 + $0x8] sm:$0xff]
    %v30 = vld [vmem:[%s0 + $0x10] sm:$0xff]
    %v31 = vld [vmem:[%s0 + $0x18] sm:$0xff]
    %v32 = vld [vmem:[%s0 + $0x20] sm:$0xff]
    %v33 = vld [vmem:[%s0 + $0x28] sm:$0xff]
    %v34 = vld [vmem:[%s0 + $0x30] sm:$0xff]
    %v35 = vld [vmem:[%s0 + $0x38] sm:$0xff]
    %v36 = vpack.c.bf16 %v29, %v28
    %v37 = vpack.c.bf16 %v31, %v30
    %v38 = vpack.c.bf16 %v33, %v32
    %v39 = vpack.c.bf16 %v35, %v34
    %v40 = vld [vmem:[%s1] sm:$0xf]
    %v41 = vld [vmem:[%s1 + $0x4] sm:$0xf]
    %v42 = vld [vmem:[%s2] sm:$0x1]
    %v44 = vlaneseq
    %v45 = vshrl.u32 %v44, 7
    %v46 = vsub.s32 0, %v45
    %v47 = vrot.slane %v42, %v46
    %v51 = vunpack.c.l.b16 %v40
    %v52 = vunpack.c.l.b16 %v41
    %v53 = vpack.c.b16 %v52, %v51
    %vm55 = vcmask 130048
    %v57 = vsel %vm55, %v36, 0
    %v60 = vsel %vm55, %v37, 0
    %v63 = vsel %vm55, %v38, 0
    %v66 = vsel %vm55, %v39, 0
    %68 = vmatprep.subr.bf16.mxu0 0
    %69 = vmatpush1.bf16.msra.mxu0 %v53
    %70 = vmatprep.subr.bf16.mxu0 0
    %71 = vmatpush1.bf16.msra.mxu0 0
    %72 = vmatprep.subr.bf16.mxu0 0
    %73 = vmatpush1.bf16.msra.mxu0 0
    %74 = vmatprep.subr.bf16.mxu0 0
    %75 = vmatpush1.bf16.msra.mxu0 0
    %76 = vmatprep.subr.bf16.mxu0 0
    %77 = vmatpush1.bf16.msra.mxu0 0
    %78 = vmatprep.subr.bf16.mxu0 0
    %79 = vmatpush1.bf16.msra.mxu0 0
    %80 = vmatprep.subr.bf16.mxu0 0
    %81 = vmatpush1.bf16.msra.mxu0 0
    %82 = vmatprep.subr.bf16.mxu0 0
    %83 = vmatpush1.bf16.msra.mxu0 0
    %84 = vmatprep.subr.bf16.mxu0 0
    %85 = vmatpush1.bf16.msra.mxu0 0
    %86 = vmatprep.subr.bf16.mxu0 0
    %87 = vmatpush1.bf16.msra.mxu0 0
    %88 = vmatprep.subr.bf16.mxu0 0
    %89 = vmatpush1.bf16.msra.mxu0 0
    %90 = vmatprep.subr.bf16.mxu0 0
    %91 = vmatpush1.bf16.msra.mxu0 0
    %92 = vmatprep.subr.bf16.mxu0 0
    %93 = vmatpush1.bf16.msra.mxu0 0
    %94 = vmatprep.subr.bf16.mxu0 0
    %95 = vmatpush1.bf16.msra.mxu0 0
    %96 = vmatprep.subr.bf16.mxu0 0
    %97 = vmatpush1.bf16.msra.mxu0 0
    %98 = vmatprep.subr.bf16.mxu0 0
    %99 = vmatpush1.bf16.msra.mxu0 0
    %100 = vmatprep.mubr.bf16.mxu0 0
    %101 = vmatmul.mubr.bf16.gmra.mrb[0].mxu0 %v57
    %v102 = vpop.f32.mrb[0].mxu0
    %v103 = vadd.f32 %v47, %v102
    %v104 = vpop.f32.mrb[0].mxu0
    %v105 = vpop.f32.mrb[0].mxu0
    %v106 = vadd.f32 %v47, %v105
    %v107 = vpop.f32.mrb[0].mxu0
    %108 = vmatprep.mubr.bf16.mxu0 0
    %109 = vmatmul.mubr.bf16.gmra.mrb[0].mxu0 %v60
    %v110 = vpop.f32.mrb[0].mxu0
    %v111 = vadd.f32 %v47, %v110
    %v112 = vpop.f32.mrb[0].mxu0
    %v113 = vpop.f32.mrb[0].mxu0
    %v114 = vadd.f32 %v47, %v113
    %v115 = vpop.f32.mrb[0].mxu0
    %116 = vmatprep.mubr.bf16.mxu0 0
    %117 = vmatmul.mubr.bf16.gmra.mrb[0].mxu0 %v63
    %v118 = vpop.f32.mrb[0].mxu0
    %v119 = vadd.f32 %v47, %v118
    %v120 = vpop.f32.mrb[0].mxu0
    %v121 = vpop.f32.mrb[0].mxu0
    %v122 = vadd.f32 %v47, %v121
    %v123 = vpop.f32.mrb[0].mxu0
    %124 = vmatprep.mubr.bf16.mxu0 0
    %125 = vmatmul.mubr.bf16.gmra.mrb[0].mxu0 %v66
    %v126 = vpop.f32.mrb[0].mxu0
    %v127 = vadd.f32 %v47, %v126
    %v128 = vpop.f32.mrb[0].mxu0
    %v129 = vpop.f32.mrb[0].mxu0
    %v130 = vadd.f32 %v47, %v129
    %v131 = vpop.f32.mrb[0].mxu0
    %132 = vdwg.mxu0
    %vm133 = vcmp.gt.f32.partialorder %v103, 0.0
    %vm134 = vcmp.gt.f32.partialorder %v106, 0.0
    %vm135 = vcmp.gt.f32.partialorder %v111, 0.0
    %vm136 = vcmp.gt.f32.partialorder %v114, 0.0
    %vm137 = vcmp.gt.f32.partialorder %v119, 0.0
    %vm138 = vcmp.gt.f32.partialorder %v122, 0.0
    %vm139 = vcmp.gt.f32.partialorder %v127, 0.0
    %vm140 = vcmp.gt.f32.partialorder %v130, 0.0
    %v141 = vmin.f32 %v103, 0.0
    %v142 = vmin.f32 %v106, 0.0
    %v143 = vmin.f32 %v111, 0.0
    %v144 = vmin.f32 %v114, 0.0
    %v145 = vmin.f32 %v119, 0.0
    %v146 = vmin.f32 %v122, 0.0
    %v147 = vmin.f32 %v127, 0.0
    %v148 = vmin.f32 %v130, 0.0
    %v149 = vmul.f32 %v141, 1.442695
    %v150 = vpow.pop %v149
    %v151 = vmul.f32 %v142, 1.442695
    %v152 = vpow.pop %v151
    %v153 = vmul.f32 %v143, 1.442695
    %v154 = vpow.pop %v153
    %v155 = vmul.f32 %v144, 1.442695
    %v156 = vpow.pop %v155
    %v157 = vmul.f32 %v145, 1.442695
    %v158 = vpow.pop %v157
    %v159 = vmul.f32 %v146, 1.442695
    %v160 = vpow.pop %v159
    %v161 = vmul.f32 %v147, 1.442695
    %v162 = vpow.pop %v161
    %v163 = vmul.f32 %v148, 1.442695
    %v164 = vpow.pop %v163
    %v165 = vsub.f32 %v150, 1.0
    %v166 = vsub.f32 %v152, 1.0
    %v167 = vsub.f32 %v154, 1.0
    %v168 = vsub.f32 %v156, 1.0
    %v169 = vsub.f32 %v158, 1.0
    %v170 = vsub.f32 %v160, 1.0
    %v171 = vsub.f32 %v162, 1.0
    %v172 = vsub.f32 %v164, 1.0
    %v173 = vsel %vm133, %v103, %v165
    %v174 = vsel %vm134, %v106, %v166
    %v175 = vsel %vm135, %v111, %v167
    %v176 = vsel %vm136, %v114, %v168
    %v177 = vsel %vm137, %v119, %v169
    %v178 = vsel %vm138, %v122, %v170
    %v179 = vsel %vm139, %v127, %v171
    %v180 = vsel %vm140, %v130, %v172
    %v181 = vpack.c.bf16 %v174, %v173
    %v182 = vpack.c.bf16 %v176, %v175
    %v183 = vpack.c.bf16 %v178, %v177
    %v184 = vpack.c.bf16 %v180, %v179
    %v185 = vld [vmem:[%s3] sm:$0xf]
    %v186 = vld [vmem:[%s3 + $0x4] sm:$0xf]
    %v187 = vld [vmem:[%s3 + $0x8] sm:$0xf]
    %v188 = vld [vmem:[%s3 + $0xc] sm:$0xf]
    %v189 = vld [vmem:[%s4] sm:$0x1]
    %v191 = vlaneseq
    %v192 = vshrl.u32 %v191, 7
    %v193 = vsub.s32 0, %v192
    %v194 = vrot.slane %v189, %v193
    %v200 = vunpack.c.l.b16 %v185
    %v201 = vunpack.c.l.b16 %v186
    %v202 = vunpack.c.l.b16 %v187
    %v203 = vunpack.c.l.b16 %v188
    %v204 = vpack.c.b16 %v201, %v200
    %v205 = vpack.c.b16 %v203, %v202
    %vm208 = vcmask 261120
    %v210 = vsel %vm208, %v181, 0
    %v213 = vsel %vm208, %v182, 0
    %v216 = vsel %vm208, %v183, 0
    %v219 = vsel %vm208, %v184, 0
    %221 = vmatprep.subr.bf16.mxu0 0
    %222 = vmatpush1.bf16.msra.mxu0 %v204
    %223 = vmatprep.subr.bf16.mxu0 0
    %224 = vmatpush1.bf16.msra.mxu0 %v205
    %225 = vmatprep.subr.bf16.mxu0 0
    %226 = vmatpush1.bf16.msra.mxu0 0
    %227 = vmatprep.subr.bf16.mxu0 0
    %228 = vmatpush1.bf16.msra.mxu0 0
    %229 = vmatprep.subr.bf16.mxu0 0
    %230 = vmatpush1.bf16.msra.mxu0 0
    %231 = vmatprep.subr.bf16.mxu0 0
    %232 = vmatpush1.bf16.msra.mxu0 0
    %233 = vmatprep.subr.bf16.mxu0 0
    %234 = vmatpush1.bf16.msra.mxu0 0
    %235 = vmatprep.subr.bf16.mxu0 0
    %236 = vmatpush1.bf16.msra.mxu0 0
    %237 = vmatprep.subr.bf16.mxu0 0
    %238 = vmatpush1.bf16.msra.mxu0 0
    %239 = vmatprep.subr.bf16.mxu0 0
    %240 = vmatpush1.bf16.msra.mxu0 0
    %241 = vmatprep.subr.bf16.mxu0 0
    %242 = vmatpush1.bf16.msra.mxu0 0
    %243 = vmatprep.subr.bf16.mxu0 0
    %244 = vmatpush1.bf16.msra.mxu0 0
    %245 = vmatprep.subr.bf16.mxu0 0
    %246 = vmatpush1.bf16.msra.mxu0 0
    %247 = vmatprep.subr.bf16.mxu0 0
    %248 = vmatpush1.bf16.msra.mxu0 0
    %249 = vmatprep.subr.bf16.mxu0 0
    %250 = vmatpush1.bf16.msra.mxu0 0
    %251 = vmatprep.subr.bf16.mxu0 0
    %252 = vmatpush1.bf16.msra.mxu0 0
    %253 = vmatprep.mubr.bf16.mxu0 0
    %254 = vmatmul.mubr.bf16.gmra.mrb[0].mxu0 %v210
    %v255 = vpop.f32.mrb[0].mxu0
    %v256 = vadd.f32 %v194, %v255
    %v257 = vpop.f32.mrb[0].mxu0
    %v258 = vpop.f32.mrb[0].mxu0
    %v259 = vadd.f32 %v194, %v258
    %v260 = vpop.f32.mrb[0].mxu0
    %261 = vmatprep.mubr.bf16.mxu0 0
    %262 = vmatmul.mubr.bf16.gmra.mrb[0].mxu0 %v213
    %v263 = vpop.f32.mrb[0].mxu0
    %v264 = vadd.f32 %v194, %v263
    %v265 = vpop.f32.mrb[0].mxu0
    %v266 = vpop.f32.mrb[0].mxu0
    %v267 = vadd.f32 %v194, %v266
    %v268 = vpop.f32.mrb[0].mxu0
    %269 = vmatprep.mubr.bf16.mxu0 0
    %270 = vmatmul.mubr.bf16.gmra.mrb[0].mxu0 %v216
    %v271 = vpop.f32.mrb[0].mxu0
    %v272 = vadd.f32 %v194, %v271
    %v273 = vpop.f32.mrb[0].mxu0
    %v274 = vpop.f32.mrb[0].mxu0
    %v275 = vadd.f32 %v194, %v274
    %v276 = vpop.f32.mrb[0].mxu0
    %277 = vmatprep.mubr.bf16.mxu0 0
    %278 = vmatmul.mubr.bf16.gmra.mrb[0].mxu0 %v219
    %v279 = vpop.f32.mrb[0].mxu0
    %v280 = vadd.f32 %v194, %v279
    %v281 = vpop.f32.mrb[0].mxu0
    %v282 = vpop.f32.mrb[0].mxu0
    %v283 = vadd.f32 %v194, %v282
    %v284 = vpop.f32.mrb[0].mxu0
    %285 = vdwg.mxu0
    %vm286 = vcmp.gt.f32.partialorder %v256, 0.0
    %vm287 = vcmp.gt.f32.partialorder %v259, 0.0
    %vm288 = vcmp.gt.f32.partialorder %v264, 0.0
    %vm289 = vcmp.gt.f32.partialorder %v267, 0.0
    %vm290 = vcmp.gt.f32.partialorder %v272, 0.0
    %vm291 = vcmp.gt.f32.partialorder %v275, 0.0
    %vm292 = vcmp.gt.f32.partialorder %v280, 0.0
    %vm293 = vcmp.gt.f32.partialorder %v283, 0.0
    %v294 = vmin.f32 %v256, 0.0
    %v295 = vmin.f32 %v259, 0.0
    %v296 = vmin.f32 %v264, 0.0
    %v297 = vmin.f32 %v267, 0.0
    %v298 = vmin.f32 %v272, 0.0
    %v299 = vmin.f32 %v275, 0.0
    %v300 = vmin.f32 %v280, 0.0
    %v301 = vmin.f32 %v283, 0.0
    %v302 = vmul.f32 %v294, 1.442695
    %v303 = vpow.pop %v302
    %v304 = vmul.f32 %v295, 1.442695
    %v305 = vpow.pop %v304
    %v306 = vmul.f32 %v296, 1.442695
    %v307 = vpow.pop %v306
    %v308 = vmul.f32 %v297, 1.442695
    %v309 = vpow.pop %v308
    %v310 = vmul.f32 %v298, 1.442695
    %v311 = vpow.pop %v310
    %v312 = vmul.f32 %v299, 1.442695
    %v313 = vpow.pop %v312
    %v314 = vmul.f32 %v300, 1.442695
    %v315 = vpow.pop %v314
    %v316 = vmul.f32 %v301, 1.442695
    %v317 = vpow.pop %v316
    %v318 = vsub.f32 %v303, 1.0
    %v319 = vsub.f32 %v305, 1.0
    %v320 = vsub.f32 %v307, 1.0
    %v321 = vsub.f32 %v309, 1.0
    %v322 = vsub.f32 %v311, 1.0
    %v323 = vsub.f32 %v313, 1.0
    %v324 = vsub.f32 %v315, 1.0
    %v325 = vsub.f32 %v317, 1.0
    %v326 = vsel %vm286, %v256, %v318
    %v327 = vsel %vm287, %v259, %v319
    %v328 = vsel %vm288, %v264, %v320
    %v329 = vsel %vm289, %v267, %v321
    %v330 = vsel %vm290, %v272, %v322
    %v331 = vsel %vm291, %v275, %v323
    %v332 = vsel %vm292, %v280, %v324
    %v333 = vsel %vm293, %v283, %v325
    %v334 = vpack.c.bf16 %v327, %v326
    %v335 = vpack.c.bf16 %v329, %v328
    %v336 = vpack.c.bf16 %v331, %v330
    %v337 = vpack.c.bf16 %v333, %v332
    %v338 = vld [vmem:[%s5] sm:$0xff]
    %v339 = vld [vmem:[%s5 + $0x8] sm:$0xff]
    %v340 = vld [vmem:[%s5 + $0x10] sm:$0xff]
    %v341 = vld [vmem:[%s5 + $0x18] sm:$0xff]
    %v342 = vld [vmem:[%s6] sm:$0x3]
    %v344 = vlaneseq
    %v345 = vshrl.u32 %v344, 7
    %v346 = vsub.s32 0, %v345
    %v347 = vrot.slane %v342, %v346
    %v348 = vlaneseq
    %v349 = vshrl.u32 %v348, 7
    %v350 = vsub.s32 1, %v349
    %v351 = vrot.slane %v342, %v350
    %v358 = vunpack.c.l.b16 %v338
    %v359 = vunpack.c.h.b16 %v338
    %v360 = vunpack.c.l.b16 %v339
    %v361 = vunpack.c.h.b16 %v339
    %v362 = vunpack.c.l.b16 %v340
    %v363 = vunpack.c.h.b16 %v340
    %v364 = vunpack.c.l.b16 %v341
    %v365 = vunpack.c.h.b16 %v341
    %v366 = vpack.c.b16 %v360, %v358
    %v367 = vpack.c.b16 %v361, %v359
    %v368 = vpack.c.b16 %v364, %v362
    %v369 = vpack.c.b16 %v365, %v363
    %v375 = vsel %vm208, %v334, 0
    %v378 = vsel %vm208, %v335, 0
    %v381 = vsel %vm208, %v336, 0
    %v384 = vsel %vm208, %v337, 0
    %386 = vmatprep.subr.bf16.mxu0 %v367
    %387 = vmatpush1.bf16.msra.mxu0 %v366
    %388 = vmatprep.subr.bf16.mxu0 %v369
    %389 = vmatpush1.bf16.msra.mxu0 %v368
    %390 = vmatprep.subr.bf16.mxu0 0
    %391 = vmatpush1.bf16.msra.mxu0 0
    %392 = vmatprep.subr.bf16.mxu0 0
    %393 = vmatpush1.bf16.msra.mxu0 0
    %394 = vmatprep.subr.bf16.mxu0 0
    %395 = vmatpush1.bf16.msra.mxu0 0
    %396 = vmatprep.subr.bf16.mxu0 0
    %397 = vmatpush1.bf16.msra.mxu0 0
    %398 = vmatprep.subr.bf16.mxu0 0
    %399 = vmatpush1.bf16.msra.mxu0 0
    %400 = vmatprep.subr.bf16.mxu0 0
    %401 = vmatpush1.bf16.msra.mxu0 0
    %402 = vmatprep.subr.bf16.mxu0 0
    %403 = vmatpush1.bf16.msra.mxu0 0
    %404 = vmatprep.subr.bf16.mxu0 0
    %405 = vmatpush1.bf16.msra.mxu0 0
    %406 = vmatprep.subr.bf16.mxu0 0
    %407 = vmatpush1.bf16.msra.mxu0 0
    %408 = vmatprep.subr.bf16.mxu0 0
    %409 = vmatpush1.bf16.msra.mxu0 0
    %410 = vmatprep.subr.bf16.mxu0 0
    %411 = vmatpush1.bf16.msra.mxu0 0
    %412 = vmatprep.subr.bf16.mxu0 0
    %413 = vmatpush1.bf16.msra.mxu0 0
    %414 = vmatprep.subr.bf16.mxu0 0
    %415 = vmatpush1.bf16.msra.mxu0 0
    %416 = vmatprep.subr.bf16.mxu0 0
    %417 = vmatpush1.bf16.msra.mxu0 0
    %418 = vmatprep.mubr.bf16.mxu0 0
    %419 = vmatmul.mubr.bf16.gmra.mrb[0].mxu0 %v375
    %v420 = vpop.f32.mrb[0].mxu0
    %v421 = vadd.f32 %v347, %v420
    %v422 = vpop.f32.mrb[0].mxu0
    %v423 = vadd.f32 %v351, %v422
    %v424 = vpop.f32.mrb[0].mxu0
    %v425 = vadd.f32 %v347, %v424
    %v426 = vpop.f32.mrb[0].mxu0
    %v427 = vadd.f32 %v351, %v426
    %428 = vmatprep.mubr.bf16.mxu0 0
    %429 = vmatmul.mubr.bf16.gmra.mrb[0].mxu0 %v378
    %v430 = vpop.f32.mrb[0].mxu0
    %v431 = vadd.f32 %v347, %v430
    %v432 = vpop.f32.mrb[0].mxu0
    %v433 = vadd.f32 %v351, %v432
    %v434 = vpop.f32.mrb[0].mxu0
    %v435 = vadd.f32 %v347, %v434
    %v436 = vpop.f32.mrb[0].mxu0
    %v437 = vadd.f32 %v351, %v436
    %438 = vmatprep.mubr.bf16.mxu0 0
    %439 = vmatmul.mubr.bf16.gmra.mrb[0].mxu0 %v381
    %v440 = vpop.f32.mrb[0].mxu0
    %v441 = vadd.f32 %v347, %v440
    %v442 = vpop.f32.mrb[0].mxu0
    %v443 = vadd.f32 %v351, %v442
    %v444 = vpop.f32.mrb[0].mxu0
    %v445 = vadd.f32 %v347, %v444
    %v446 = vpop.f32.mrb[0].mxu0
    %v447 = vadd.f32 %v351, %v446
    %448 = vmatprep.mubr.bf16.mxu0 0
    %449 = vmatmul.mubr.bf16.gmra.mrb[0].mxu0 %v384
    %v450 = vpop.f32.mrb[0].mxu0
    %v451 = vadd.f32 %v347, %v450
    %v452 = vpop.f32.mrb[0].mxu0
    %v453 = vadd.f32 %v351, %v452
    %v454 = vpop.f32.mrb[0].mxu0
    %v455 = vadd.f32 %v347, %v454
    %v456 = vpop.f32.mrb[0].mxu0
    %v457 = vadd.f32 %v351, %v456
    %458 = vdwg.mxu0
    %459 = vst [vmem:[#allocation2] sm:$0xff] %v421
    %460 = vst [vmem:[#allocation2 + $0x8] sm:$0xff] %v423
    %461 = vst [vmem:[#allocation2 + $0x10] sm:$0xff] %v425
    %462 = vst [vmem:[#allocation2 + $0x18] sm:$0xff] %v427
    %463 = vst [vmem:[#allocation2 + $0x20] sm:$0xff] %v431
    %464 = vst [vmem:[#allocation2 + $0x28] sm:$0xff] %v433
    %465 = vst [vmem:[#allocation2 + $0x30] sm:$0xff] %v435
    %466 = vst [vmem:[#allocation2 + $0x38] sm:$0xff] %v437
    %467 = vst [vmem:[#allocation2 + $0x40] sm:$0xff] %v441
    %468 = vst [vmem:[#allocation2 + $0x48] sm:$0xff] %v443
    %469 = vst [vmem:[#allocation2 + $0x50] sm:$0xff] %v445
    %470 = vst [vmem:[#allocation2 + $0x58] sm:$0xff] %v447
    %471 = vst [vmem:[#allocation2 + $0x60] sm:$0xff] %v451
    %472 = vst [vmem:[#allocation2 + $0x68] sm:$0xff] %v453
    %473 = vst [vmem:[#allocation2 + $0x70] sm:$0xff] %v455
    %474 = vst [vmem:[#allocation2 + $0x78] sm:$0xff] %v457
    // Predicated region
    $region30: #{autoencoder_cmap_forward.1} parent=1 // pred_check
      _
    $region31: #{autoencoder_cmap_forward.1} parent=1 // pred_check_branch
      %476 = sbr.rel (0) target = $region33
    $region32: #{autoencoder_cmap_forward.1} parent=1 // pred_region
      %s478 = ssub.s32 2048, 2048
      %479 = vsyncadd [#allocation3], %s478
      %s480 = sshll.u32 [#allocation2], 4
      %s481 = int_to_ptr.vmem [resolvable:$true] %s480
      %486 = dma.vmem_to_hbm [thread:$0]  %s481, 2048, %s7, [#allocation3], 256, 256, 16
    $region33: #{autoencoder_cmap_forward.1} parent=1 // pred_fallthru
      _
    // Predicated region
    $region34: #{autoencoder_cmap_forward.1} parent=1 // pred_check
      _
    $region35: #{autoencoder_cmap_forward.1} parent=1 // pred_check_branch
      %488 = sbr.rel (0) target = $region37
    $region36: #{autoencoder_cmap_forward.1} parent=1 // pred_region
      %489 = dma.done [#allocation3], 2048
    $region37: #{autoencoder_cmap_forward.1} parent=1 // pred_fallthru
      _
    %490 = vsyncpa [#allocation3], 1

</llo_original>
